<compile_context>
chip_gen: v7x
topology: tpu7x:2x2x1
jax: 0.10.0
libtpu: 0.0.40
codegen_flags: <defaults>
</compile_context>

<pallas_src>
import functools

import jax
import jax.numpy as jnp
from jax.experimental import pallas as pl
from jax.experimental.pallas import tpu as pltpu


N_FEATURES = 3
LAYER_SIZES = [10, 20, 10]
N_ESTIMATIONS = 1

_DIMS = [N_FEATURES, *LAYER_SIZES, N_ESTIMATIONS]        # [3, 10, 20, 10, 1]

# Static column layout of the packed parameter block: for layer i the
# transposed weight (out_i, in_i) occupies columns [c0, c0 + in_i) and the bias
# (out_i,) sits in column c0 + in_i.  Rows 0..out_i-1 are used per layer.
_LAYER_LAYOUT = []
_col = 0
for _fin, _fout in zip(_DIMS[:-1], _DIMS[1:]):
    _LAYER_LAYOUT.append((_col, _fin, _fout))
    _col += _fin + 1
assert _col <= 128
_PACK_ROWS = 32          # >= max(out_i) = 20, multiple of 8 sublanes
_PACK_COLS = 128         # one full lane group

_FLOPS_PER_EDGE = 2 * sum(fi * fo for fi, fo in zip(_DIMS[:-1], _DIMS[1:]))  # 880
_BYTES_PER_EDGE = 4 * (N_FEATURES + N_ESTIMATIONS)                           # 16


def _round_up(x, m):
    return ((x + m - 1) // m) * m


def _dqn_kernel(x_ref, p_ref, o_ref):
    """Edge-wise MLP on one lane-dense (C, TM) tile (channels on sublanes)."""
    h = x_ref[...]                                            # (3, TM) f32
    last = len(_LAYER_LAYOUT) - 1
    for li, (c0, fin, fout) in enumerate(_LAYER_LAYOUT):      # static unroll (4 layers)
        wt = p_ref[0:fout, c0:c0 + fin]                       # (out, in)
        b = p_ref[0:fout, c0 + fin:c0 + fin + 1]              # (out, 1)
        h = jnp.dot(wt, h, preferred_element_type=jnp.float32) + b
        if li != last:
            h = jnp.maximum(h, 0.0)                           # ReLU on all but last layer
    o_ref[...] = h.astype(o_ref.dtype)                        # (1, TM) lane-dense store


def _pack_params(params):
    """Pack transposed weights + biases into one (32, 128) f32 block."""
    blk = jnp.zeros((_PACK_ROWS, _PACK_COLS), jnp.float32)
    for li, (c0, fin, fout) in enumerate(_LAYER_LAYOUT):
        w = params[f"w{li + 1}"].astype(jnp.float32)          # (in, out)
        b = params[f"b{li + 1}"].astype(jnp.float32)          # (1, out)
        blk = blk.at[:fout, c0:c0 + fin].set(w.T)
        blk = blk.at[:fout, c0 + fin].set(b[0])
    return blk


@functools.partial(jax.jit, static_argnames=("tile_l",))
def dqn_edgewise_fc_forward(x_ncl, params, *, tile_l=4096):
    """Forward pass matching DQNEdgeWiseFC.forward.

    Args:
      x_ncl:  (B, n_features, L) float32 — PyTorch NCL layout (L = n_edges).
      params: dict with w1..w4 (in, out) and b1..b4 (1, out) float32.
      tile_l: lanes (edges) processed per grid step; multiple of 128.
    Returns:
      (B, 1, L) float32, identical semantics to the PyTorch module.
    """
    B, C, L = x_ncl.shape
    assert C == N_FEATURES
    assert tile_l % 128 == 0

    # Lane tile: multiple of 128, as large as useful, never exceeding padded L.
    tm = min(tile_l, _round_up(L, 128))
    L_pad = _round_up(L, tm)

    x = x_ncl.astype(jnp.float32)
    if L_pad != L:
        # Padded edges produce bias-only garbage that is sliced off below.
        x = jnp.pad(x, ((0, 0), (0, 0), (0, L_pad - L)))

    packed = _pack_params(params)

    grid = (B, L_pad // tm)
    M = B * L

    out = pl.pallas_call(
        _dqn_kernel,
        out_shape=jax.ShapeDtypeStruct((B, N_ESTIMATIONS, L_pad), jnp.float32),
        grid=grid,
        in_specs=[
            # Activations: batch squeezed, channels on sublanes, edges lane-dense.
            pl.BlockSpec((None, C, tm), lambda b, l: (b, 0, l)),
            # Packed parameters: one constant-index resident block.
            pl.BlockSpec((_PACK_ROWS, _PACK_COLS), lambda b, l: (0, 0)),
        ],
        out_specs=pl.BlockSpec((None, N_ESTIMATIONS, tm), lambda b, l: (b, 0, l)),
        compiler_params=pltpu.CompilerParams(
            dimension_semantics=("parallel", "parallel")),
        cost_estimate=pl.CostEstimate(
            flops=_FLOPS_PER_EDGE * M,
            transcendentals=0,
            bytes_accessed=_BYTES_PER_EDGE * M + 4 * _PACK_ROWS * _PACK_COLS),
    )(x, packed)

    return out[:, :, :L]                                       # drop lane padding


def init_params(key):
    """Deterministic init mirroring Conv1d shapes (weights stored as (in, out))."""
    params = {}
    for idx, (fan_in, fan_out) in enumerate(zip(_DIMS[:-1], _DIMS[1:]), start=1):
        key, kw, kb = jax.random.split(key, 3)
        bound = 1.0 / jnp.sqrt(float(fan_in))       # PyTorch Conv1d default range
        params[f"w{idx}"] = jax.random.uniform(
            kw, (fan_in, fan_out), jnp.float32, -bound, bound)
        params[f"b{idx}"] = jax.random.uniform(
            kb, (1, fan_out), jnp.float32, -bound, bound)
    return params


def _reference_forward(x_ncl, params):
    """Pure-JAX reference of the same forward pass (for verification)."""
    B, C, L = x_ncl.shape
    h = jnp.transpose(x_ncl, (0, 2, 1)).reshape(B * L, C)
    h = jnp.maximum(h @ params["w1"] + params["b1"], 0.0)
    h = jnp.maximum(h @ params["w2"] + params["b2"], 0.0)
    h = jnp.maximum(h @ params["w3"] + params["b3"], 0.0)
    h = h @ params["w4"] + params["b4"]
    return jnp.transpose(h.reshape(B, L, N_ESTIMATIONS), (0, 2, 1))


if __name__ == "__main__":
    key = jax.random.PRNGKey(0)
    k_params, k_x = jax.random.split(key)

    params = init_params(k_params)

    # Small problem: batch=2 mazes, n_features=3 edge features, n_edges=16.
    B, L = 2, 16
    x = jax.random.normal(k_x, (B, N_FEATURES, L), jnp.float32)

    out = dqn_edgewise_fc_forward(x, params)
    out = jax.block_until_ready(out)

    ref = _reference_forward(x, params)
    assert out.shape == (B, 1, L)
    assert jnp.allclose(out, ref, atol=1e-5, rtol=1e-5)

    # TODO(synk): `features` / `estimate_q_values` do maze-graph traversal on the
    # host and are not part of the nn forward pass; they are not implemented here.
    print("KERNEL_OK")
</pallas_src>

<mosaic_0001>
module attributes {stable_mosaic.version = 11 : i64} {
  func.func @_dqn_kernel(%arg0: i32, %arg1: i32, %arg2: memref<1x3x128xf32, #tpu.memory_space<vmem>>, %arg3: memref<32x128xf32, #tpu.memory_space<vmem>>, %arg4: memref<1x1x128xf32, #tpu.memory_space<vmem>>) attributes {dimension_semantics = [#tpu.dimension_semantics<parallel>, #tpu.dimension_semantics<parallel>], iteration_bounds = array<i64: 2, 1>, scalar_prefetch = 0 : i64, scratch_operands = 0 : i64, tpu.core_type = #tpu.core_type<tc>, window_params = [{transform_indices = @transform_0, window_bounds = array<i64: 1, 3, 128>}, {pipeline_mode = #tpu.pipeline_mode<synchronous>, transform_indices = @transform_1, window_bounds = array<i64: 32, 128>}, {transform_indices = @transform_2, window_bounds = array<i64: 1, 1, 128>}]} {
    %c0 = arith.constant 0 : index
    %c0_0 = arith.constant 0 : index
    %c0_1 = arith.constant 0 : index
    %0 = vector.load %arg2[%c0, %c0_0, %c0_1] : memref<1x3x128xf32, #tpu.memory_space<vmem>>, vector<1x3x128xf32>
    %1 = vector.shape_cast %0 : vector<1x3x128xf32> to vector<3x128xf32>
    %c0_2 = arith.constant 0 : index
    %c0_3 = arith.constant 0 : index
    %2 = vector.load %arg3[%c0_2, %c0_3] : memref<32x128xf32, #tpu.memory_space<vmem>>, vector<10x3xf32>
    %c0_4 = arith.constant 0 : index
    %c3 = arith.constant 3 : index
    %3 = vector.load %arg3[%c0_4, %c3] : memref<32x128xf32, #tpu.memory_space<vmem>>, vector<10x1xf32>
    %cst = arith.constant dense<0.000000e+00> : vector<10x128xf32>
    %4 = tpu.matmul %2, %1, %cst {dimension_numbers = #tpu.dot_dimension_numbers<[1], [0], [0], [1], [0, 0, 1, 1], [], []>} : vector<10x3xf32>, vector<3x128xf32>, vector<10x128xf32> -> vector<10x128xf32>
    %5 = vector.broadcast %3 : vector<10x1xf32> to vector<10x128xf32>
    %6 = arith.addf %4, %5 : vector<10x128xf32>
    %cst_5 = arith.constant 0.000000e+00 : f32
    %7 = vector.broadcast %cst_5 : f32 to vector<10x128xf32>
    %8 = arith.maximumf %6, %7 : vector<10x128xf32>
    %c0_6 = arith.constant 0 : index
    %c4 = arith.constant 4 : index
    %9 = vector.load %arg3[%c0_6, %c4] : memref<32x128xf32, #tpu.memory_space<vmem>>, vector<20x10xf32>
    %c0_7 = arith.constant 0 : index
    %c14 = arith.constant 14 : index
    %10 = vector.load %arg3[%c0_7, %c14] : memref<32x128xf32, #tpu.memory_space<vmem>>, vector<20x1xf32>
    %cst_8 = arith.constant dense<0.000000e+00> : vector<20x128xf32>
    %11 = tpu.matmul %9, %8, %cst_8 {dimension_numbers = #tpu.dot_dimension_numbers<[1], [0], [0], [1], [0, 0, 1, 1], [], []>} : vector<20x10xf32>, vector<10x128xf32>, vector<20x128xf32> -> vector<20x128xf32>
    %12 = vector.broadcast %10 : vector<20x1xf32> to vector<20x128xf32>
    %13 = arith.addf %11, %12 : vector<20x128xf32>
    %cst_9 = arith.constant 0.000000e+00 : f32
    %14 = vector.broadcast %cst_9 : f32 to vector<20x128xf32>
    %15 = arith.maximumf %13, %14 : vector<20x128xf32>
    %c0_10 = arith.constant 0 : index
    %c15 = arith.constant 15 : index
    %16 = vector.load %arg3[%c0_10, %c15] : memref<32x128xf32, #tpu.memory_space<vmem>>, vector<10x20xf32>
    %c0_11 = arith.constant 0 : index
    %c35 = arith.constant 35 : index
    %17 = vector.load %arg3[%c0_11, %c35] : memref<32x128xf32, #tpu.memory_space<vmem>>, vector<10x1xf32>
    %cst_12 = arith.constant dense<0.000000e+00> : vector<10x128xf32>
    %18 = tpu.matmul %16, %15, %cst_12 {dimension_numbers = #tpu.dot_dimension_numbers<[1], [0], [0], [1], [0, 0, 1, 1], [], []>} : vector<10x20xf32>, vector<20x128xf32>, vector<10x128xf32> -> vector<10x128xf32>
    %19 = vector.broadcast %17 : vector<10x1xf32> to vector<10x128xf32>
    %20 = arith.addf %18, %19 : vector<10x128xf32>
    %cst_13 = arith.constant 0.000000e+00 : f32
    %21 = vector.broadcast %cst_13 : f32 to vector<10x128xf32>
    %22 = arith.maximumf %20, %21 : vector<10x128xf32>
    %c0_14 = arith.constant 0 : index
    %c36 = arith.constant 36 : index
    %23 = vector.load %arg3[%c0_14, %c36] : memref<32x128xf32, #tpu.memory_space<vmem>>, vector<1x10xf32>
    %c0_15 = arith.constant 0 : index
    %c46 = arith.constant 46 : index
    %24 = vector.load %arg3[%c0_15, %c46] : memref<32x128xf32, #tpu.memory_space<vmem>>, vector<1x1xf32>
    %cst_16 = arith.constant dense<0.000000e+00> : vector<1x128xf32>
    %25 = tpu.matmul %23, %22, %cst_16 {dimension_numbers = #tpu.dot_dimension_numbers<[1], [0], [0], [1], [0, 0, 1, 1], [], []>} : vector<1x10xf32>, vector<10x128xf32>, vector<1x128xf32> -> vector<1x128xf32>
    %26 = vector.broadcast %24 : vector<1x1xf32> to vector<1x128xf32>
    %27 = arith.addf %25, %26 : vector<1x128xf32>
    %c0_17 = arith.constant 0 : index
    %c0_18 = arith.constant 0 : index
    %c0_19 = arith.constant 0 : index
    %28 = vector.load %arg4[%c0_17, %c0_18, %c0_19] : memref<1x1x128xf32, #tpu.memory_space<vmem>>, vector<1x1x128xf32>
    %29 = vector.shape_cast %28 : vector<1x1x128xf32> to vector<1x128xf32>
    %30 = vector.shape_cast %27 : vector<1x128xf32> to vector<1x1x128xf32>
    tpu.vector_store %arg4[%c0_17, %c0_18, %c0_19], %30 {strides = array<i32>} : memref<1x1x128xf32, #tpu.memory_space<vmem>>, vector<1x1x128xf32>,
    return
  }
  func.func @transform_0(%arg0: i32, %arg1: i32) -> (i32, i32, i32) {
    %c0_i32 = arith.constant 0 : i32
    %c0_i32_0 = arith.constant 0 : i32
    return %arg0, %c0_i32, %arg1 : i32, i32, i32
  }
  func.func @transform_1(%arg0: i32, %arg1: i32) -> (i32, i32) {
    %c0_i32 = arith.constant 0 : i32
    %c0_i32_0 = arith.constant 0 : i32
    %c0_i32_1 = arith.constant 0 : i32
    return %c0_i32, %c0_i32_0 : i32, i32
  }
  func.func @transform_2(%arg0: i32, %arg1: i32) -> (i32, i32, i32) {
    %c0_i32 = arith.constant 0 : i32
    %c0_i32_0 = arith.constant 0 : i32
    return %arg0, %c0_i32, %arg1 : i32, i32, i32
  }
}

</mosaic_0001>

<llo_original>
// kernel: dqn_edgewise_fc_forward.1
$region0: #{dqn_edgewise_fc_forward.1}
  #allocation0 [shape = 'u32[]', space=smem, size = 0x4, offset = 0x4, fixed_abs, tag = 'smem constant byte address 0x4 - core index']
  #allocation1 [shape = 'u32[144,128]{1,0:T(1,128)}', space=vmem, size = 0x12000, scoped, tag = 'internal scratch']
  %s0 = inlined_call_operand.vmem [shape: f32[2,3,128], index: 0, kind: input, shape index: {}]
  %s1 = inlined_call_operand.vmem [shape: f32[32,128], index: 1, kind: input, shape index: {}]
  %s2 = inlined_call_operand.hbm [shape: f32[2,1,128], index: 2, kind: output, shape index: {}]
  %s3 = sld [smem:[#allocation0]]
  $region41: #{dqn_edgewise_fc_forward.1} parent=0
    _
  %s5 = ssub.s32 1, %s3
  %s6 = scalar_select 0, %s5, %s3
  $region1: #{dqn_edgewise_fc_forward.1} parent=0
    #allocation2 [shape = 'u8[1024]{0}', space=vmem, size = 0x400, scoped, tag = 'output window, operand 0']
    #allocation3 [shape = 's32[2]{0}', space=sflag, size = 0x8, scoped, tag = 'scoped memory for dqn_edgewise_fc_forward.1']
    %7 = vsyncpa [#allocation3], 0
    %s8 = scalar_lea.sflag [#allocation3], 1
    %9 = vsyncpa %s8, 0
    loop: start=0, step=1, limit=4
    $region2: #{dqn_edgewise_fc_forward.1} parent=1 // loop_pre_header
      _
    $region3: #{dqn_edgewise_fc_forward.1} parent=1 // loop_header
      %s11 = sphi 0, %s15
      %p12 = scmp.ge.s32.totalorder %s11, 4
      %s18 = sphi 0, %s30
      %s19 = sphi 0, %s26
      %s20 = sphi 0, %s18
      %s21 = sphi 0, %s19
      %s22 = sphi 0, %s20
      %s23 = sphi 0, %s21
      %s35 = sphi 0, %s37
      %s38 = sphi 0, %s35
      %s39 = sphi 0, %s38
      %s55 = sphi 0, %s39
      %s59 = sphi 0, %s59
      %s61 = sphi 0, %s59
      %s62 = sphi 0, %s61
      %s76 = sphi 0, %s62
      %s84 = sphi 0, %s86
      %s87 = sphi 0, %s84
      %s88 = sphi 0, %s87
      %s104 = sphi 0, %s88
    $region4: #{dqn_edgewise_fc_forward.1} parent=1 // loop_header_branch
      %14 = sbr.rel (%p12) target = $region8
    $region5: #{dqn_edgewise_fc_forward.1} parent=1 // loop_body
      %s16 = ssub.s32 %s11, 1
      %s17 = ssub.s32 %s11, 2
      %s24 = sadd.s32 1, %s19
      %p25 = scmp.ge.s32.totalorder %s24, 1
      %s26 = scalar_select %p25, 0, %s24
      %s27 = sadd.s32 1, %s18
      %s28 = scalar_select %p25, %s27, %s18
      %p29 = scmp.ge.s32.totalorder %s28, 2
      %s30 = scalar_select %p29, 0, %s28
      %s31 = ssub.s32 %s18, %s30
      %s32 = ssub.s32 %s19, %s26
      %s33 = sor.u32 %s31, %s32
      %p34 = scmp.eq.s32.totalorder %s33, 0
      %s36 = sadd.s32 %s35, 1
      %s37 = scalar_select %p34, %s35, %s36
      %p40 = pneg %p34
      %p41 = scmp.eq.s32.totalorder %s11, 1
      %p42 = por %p40, %p41
      %p43 = scmp.ne.s32.totalorder %s35, %s38
      %p44 = scmp.eq.s32.totalorder %s11, 0
      %p45 = por %p43, %p44
      %p46 = scmp.ne.s32.totalorder %s35, %s38
      %p47 = scmp.eq.s32.totalorder %s16, 1
      %p48 = por %p46, %p47
      %p49 = scmp.ne.s32.totalorder %s38, %s39
      %p50 = scmp.eq.s32.totalorder %s16, 0
      %p51 = por %p49, %p50
      %p52 = scmp.ne.s32.totalorder %s38, %s39
      %p53 = scmp.eq.s32.totalorder %s17, 1
      %p54 = por %p52, %p53
      %p56 = scmp.ne.s32.totalorder %s39, %s55
      %p57 = scmp.eq.s32.totalorder %s17, 0
      %p58 = por %p56, %p57
      %s60 = sadd.s32 %s59, 1
      %p63 = scmp.eq.s32.totalorder %s11, 1
      %p64 = scmp.ne.s32.totalorder %s59, %s61
      %p65 = scmp.eq.s32.totalorder %s11, 0
      %p66 = por %p64, %p65
      %p67 = scmp.ne.s32.totalorder %s59, %s61
      %p68 = scmp.eq.s32.totalorder %s16, 1
      %p69 = por %p67, %p68
      %p70 = scmp.ne.s32.totalorder %s61, %s62
      %p71 = scmp.eq.s32.totalorder %s16, 0
      %p72 = por %p70, %p71
      %p73 = scmp.ne.s32.totalorder %s61, %s62
      %p74 = scmp.eq.s32.totalorder %s17, 1
      %p75 = por %p73, %p74
      %p77 = scmp.ne.s32.totalorder %s62, %s76
      %p78 = scmp.eq.s32.totalorder %s17, 0
      %p79 = por %p77, %p78
      %s80 = ssub.s32 %s18, %s30
      %s81 = ssub.s32 %s19, %s26
      %s82 = sor.u32 %s80, %s81
      %p83 = scmp.eq.s32.totalorder %s82, 0
      %s85 = sadd.s32 %s84, 1
      %s86 = scalar_select %p83, %s84, %s85
      %p89 = pneg %p83
      %p90 = scmp.eq.s32.totalorder %s11, 1
      %p91 = por %p89, %p90
      %p92 = scmp.ne.s32.totalorder %s84, %s87
      %p93 = scmp.eq.s32.totalorder %s11, 0
      %p94 = por %p92, %p93
      %p95 = scmp.ne.s32.totalorder %s84, %s87
      %p96 = scmp.eq.s32.totalorder %s16, 1
      %p97 = por %p95, %p96
      %p98 = scmp.ne.s32.totalorder %s87, %s88
      %p99 = scmp.eq.s32.totalorder %s16, 0
      %p100 = por %p98, %p99
      %p101 = scmp.ne.s32.totalorder %s87, %s88
      %p102 = scmp.eq.s32.totalorder %s17, 1
      %p103 = por %p101, %p102
      %p105 = scmp.ne.s32.totalorder %s88, %s104
      %p106 = scmp.eq.s32.totalorder %s17, 0
      %p107 = por %p105, %p106
      %p108 = scmp.le.s32.totalorder 1, %s11
      %p109 = scmp.lt.s32.totalorder %s11, 3
      %p110 = pnand %p108, %p109
      %p111 = pneg %p110
      // Predicated region
      $region9: #{dqn_edgewise_fc_forward.1} parent=5 // pred_check
        _
      $region10: #{dqn_edgewise_fc_forward.1} parent=5 // pred_check_branch
        %113 = sbr.rel (%p110) target = $region12
      $region11: #{dqn_edgewise_fc_forward.1} parent=5 // pred_region
        %s114 = ssub.s32 %s11, 1
        // Predicated region
        $region13: #{dqn_edgewise_fc_forward.1} parent=11 // pred_check
          %p115 = pneg %p72
        $region14: #{dqn_edgewise_fc_forward.1} parent=11 // pred_check_branch
          %117 = sbr.rel (%p115) target = $region16
        $region15: #{dqn_edgewise_fc_forward.1} parent=11 // pred_region
          _
        $region16: #{dqn_edgewise_fc_forward.1} parent=11 // pred_fallthru
          _
      $region12: #{dqn_edgewise_fc_forward.1} parent=5 // pred_fallthru
        _
      %p118 = scmp.lt.s32.totalorder %s11, 2
      // Predicated region
      $region17: #{dqn_edgewise_fc_forward.1} parent=5 // pred_check
        %p119 = pneg %p118
      $region18: #{dqn_edgewise_fc_forward.1} parent=5 // pred_check_branch
        %121 = sbr.rel (%p119) target = $region20
      $region19: #{dqn_edgewise_fc_forward.1} parent=5 // pred_region
        // Predicated region
        $region21: #{dqn_edgewise_fc_forward.1} parent=19 // pred_check
          %p122 = pneg %p45
        $region22: #{dqn_edgewise_fc_forward.1} parent=19 // pred_check_branch
          %124 = sbr.rel (%p122) target = $region24
        $region23: #{dqn_edgewise_fc_forward.1} parent=19 // pred_region
          %p125 = scmp.lt.s32.totalorder %s18, 1
          %s126 = scalar_select %p125, %s18, 1
          %p127 = scmp.lt.s32.totalorder %s19, 0
          %s128 = scalar_select %p127, %s19, 0
          %s129 = sadd.s32 %s128, %s126
          %s130 = smul.addr %s129, 4
          %s131 = scalar_lea.vmem %s0, %s130
        $region24: #{dqn_edgewise_fc_forward.1} parent=19 // pred_fallthru
          _
      $region20: #{dqn_edgewise_fc_forward.1} parent=5 // pred_fallthru
        _
      %p132 = scmp.le.s32.totalorder 1, %s11
      %p133 = scmp.lt.s32.totalorder %s11, 3
      %p134 = pnand %p132, %p133
      %p135 = pneg %p134
      // Predicated region
      $region25: #{dqn_edgewise_fc_forward.1} parent=5 // pred_check
        _
      $region26: #{dqn_edgewise_fc_forward.1} parent=5 // pred_check_branch
        %137 = sbr.rel (%p134) target = $region28
      $region27: #{dqn_edgewise_fc_forward.1} parent=5 // pred_region
        %s138 = ssub.s32 %s11, 1
        %p139 = scmp.lt.s32.totalorder %s20, 1
        %s140 = scalar_select %p139, %s20, 1
        %p141 = scmp.lt.s32.totalorder %s21, 0
        %s142 = scalar_select %p141, %s21, 0
        %s143 = sadd.s32 %s142, %s140
        %s144 = smul.addr %s143, 4
        %s145 = scalar_lea.vmem %s0, %s144
        %p146 = pneg %p51
        %p147 = pneg %p48
        %p148 = pneg %p72
        %p149 = pneg %p69
        %p150 = pneg %p100
        %p151 = pneg %p97
        %s152 = sand.u32 %s87, 1
        %s153 = scalar_lea.sflag [#allocation3], %s152
        %s154 = sand.u32 %s87, 1
        %s155 = scalar_lea.vmem [#allocation2], %s154
        %p156 = scmp.lt.s32.totalorder %s20, 1
        %s157 = scalar_select %p156, %s20, 1
        %p158 = scmp.lt.s32.totalorder %s21, 0
        %s159 = scalar_select %p158, %s21, 0
        %s160 = sadd.s32 %s159, %s157
        %s161 = smul.addr %s160, 4
        %s162 = scalar_lea.vmem %s0, %s161
        %v163 = vld [vmem:[%s162] sm:$0x7]
        %v164 = vld [vmem:[%s1] sm:$0xff]
        %v165 = vld [vmem:[%s1 + $0x8] sm:$0x3]
        %167 = vset.pattern.permute.xlu0 3
        %168 = vperm.xlu0 %167, %v164
        %v169 = vpop.permute.xlu0 %168
        %172 = vset.pattern.permute.xlu0 3
        %173 = vperm.xlu0 %172, %v165
        %v174 = vpop.permute.xlu0 %173
        %vm176 = vcmask 23552
        %v177 = vsel %vm176, %v164, 0
        %v179 = vsel %vm176, %v165, 0
        %vm181 = vcmask 1042432
        %v183 = vsel %vm181, %v163, 0
        %185 = vmatprep.subr.mxu0 0.0
        %186 = vmatpush1.msra.mxu0 %v183
        %187 = vmatprep.subr.mxu0 0.0
        %188 = vmatpush1.msra.mxu0 0.0
        %189 = vmatprep.subr.mxu0 0.0
        %190 = vmatpush1.msra.mxu0 0.0
        %191 = vmatprep.subr.mxu0 0.0
        %192 = vmatpush1.msra.mxu0 0.0
        %193 = vmatprep.subr.mxu0 0.0
        %194 = vmatpush1.msra.mxu0 0.0
        %195 = vmatprep.subr.mxu0 0.0
        %196 = vmatpush1.msra.mxu0 0.0
        %197 = vmatprep.subr.mxu0 0.0
        %198 = vmatpush1.msra.mxu0 0.0
        %199 = vmatprep.subr.mxu0 0.0
        %200 = vmatpush1.msra.mxu0 0.0
        %201 = vmatprep.subr.mxu0 0.0
        %202 = vmatpush1.msra.mxu0 0.0
        %203 = vmatprep.subr.mxu0 0.0
        %204 = vmatpush1.msra.mxu0 0.0
        %205 = vmatprep.subr.mxu0 0.0
        %206 = vmatpush1.msra.mxu0 0.0
        %207 = vmatprep.subr.mxu0 0.0
        %208 = vmatpush1.msra.mxu0 0.0
        %209 = vmatprep.subr.mxu0 0.0
        %210 = vmatpush1.msra.mxu0 0.0
        %211 = vmatprep.subr.mxu0 0.0
        %212 = vmatpush1.msra.mxu0 0.0
        %213 = vmatprep.subr.mxu0 0.0
        %214 = vmatpush1.msra.mxu0 0.0
        %215 = vmatprep.subr.mxu0 0.0
        %216 = vmatpush1.msra.mxu0 0.0
        %217 = vmatprep.subr.mxu0 0.0
        %218 = vmatpush1.msra.mxu0 0.0
        %219 = vmatprep.subr.mxu0 0.0
        %220 = vmatpush1.msra.mxu0 0.0
        %221 = vmatprep.subr.mxu0 0.0
        %222 = vmatpush1.msra.mxu0 0.0
        %223 = vmatprep.subr.mxu0 0.0
        %224 = vmatpush1.msra.mxu0 0.0
        %225 = vmatprep.subr.mxu0 0.0
        %226 = vmatpush1.msra.mxu0 0.0
        %227 = vmatprep.subr.mxu0 0.0
        %228 = vmatpush1.msra.mxu0 0.0
        %229 = vmatprep.subr.mxu0 0.0
        %230 = vmatpush1.msra.mxu0 0.0
        %231 = vmatprep.subr.mxu0 0.0
        %232 = vmatpush1.msra.mxu0 0.0
        %233 = vmatprep.subr.mxu0 0.0
        %234 = vmatpush1.msra.mxu0 0.0
        %235 = vmatprep.subr.mxu0 0.0
        %236 = vmatpush1.msra.mxu0 0.0
        %237 = vmatprep.subr.mxu0 0.0
        %238 = vmatpush1.msra.mxu0 0.0
        %239 = vmatprep.subr.mxu0 0.0
        %240 = vmatpush1.msra.mxu0 0.0
        %241 = vmatprep.subr.mxu0 0.0
        %242 = vmatpush1.msra.mxu0 0.0
        %243 = vmatprep.subr.mxu0 0.0
        %244 = vmatpush1.msra.mxu0 0.0
        %245 = vmatprep.subr.mxu0 0.0
        %246 = vmatpush1.msra.mxu0 0.0
        %247 = vmatprep.subr.mxu0 0.0
        %248 = vmatpush1.msra.mxu0 0.0
        %249 = vmatprep.mubr.f32.mxu0 0.0
        %250 = vmatmul.mubr.f32.gmra.mrb[0].mxu0 %v177
        %v251 = vpop.f32.mrb[0].mxu0
        %v252 = vadd.f32 %v169, %v251
        %v253 = vpop.f32.mrb[0].mxu0
        %254 = vmatprep.mubr.f32.mxu0 0.0
        %255 = vmatmul.mubr.f32.gmra.mrb[0].mxu0 %v179
        %v256 = vpop.f32.mrb[0].mxu0
        %v257 = vadd.f32 %v174, %v256
        %v258 = vpop.f32.mrb[0].mxu0
        %259 = vdwg.mxu0
        %v260 = vmax.f32 %v252, 0.0
        %v261 = vmax.f32 %v257, 0.0
        %v262 = vld [vmem:[%s1] sm:$0xff]
        %v263 = vld [vmem:[%s1 + $0x8] sm:$0xff]
        %v264 = vld [vmem:[%s1 + $0x10] sm:$0xf]
        %266 = vset.pattern.permute.xlu0 14
        %267 = vperm.xlu0 %266, %v262
        %v268 = vpop.permute.xlu0 %267
        %271 = vset.pattern.permute.xlu0 14
        %272 = vperm.xlu0 %271, %v263
        %v273 = vpop.permute.xlu0 %272
        %276 = vset.pattern.permute.xlu0 14
        %277 = vperm.xlu0 %276, %v264
        %v278 = vpop.permute.xlu0 %277
        %280 = vrot.lane.b32.xlu0 %v262, 124
        %v281 = vpop.permute.xlu0 %280
        %282 = vrot.lane.b32.xlu0 %v263, 124
        %v283 = vpop.permute.xlu0 %282
        %284 = vrot.lane.b32.xlu0 %v264, 124
        %v285 = vpop.permute.xlu0 %284
        %vm286 = vcmask 80896
        %v287 = vsel %vm286, %v281, 0
        %v289 = vsel %vm286, %v283, 0
        %v291 = vsel %vm286, %v285, 0
        %vm293 = vcmask 1041408
        %v295 = vsel %vm293, %v261, 0
        %297 = vmatprep.subr.mxu0 0.0
        %298 = vmatpush1.msra.mxu0 %v260
        %299 = vmatprep.subr.mxu0 0.0
        %300 = vmatpush1.msra.mxu0 %v295
        %301 = vmatprep.subr.mxu0 0.0
        %302 = vmatpush1.msra.mxu0 0.0
        %303 = vmatprep.subr.mxu0 0.0
        %304 = vmatpush1.msra.mxu0 0.0
        %305 = vmatprep.subr.mxu0 0.0
        %306 = vmatpush1.msra.mxu0 0.0
        %307 = vmatprep.subr.mxu0 0.0
        %308 = vmatpush1.msra.mxu0 0.0
        %309 = vmatprep.subr.mxu0 0.0
        %310 = vmatpush1.msra.mxu0 0.0
        %311 = vmatprep.subr.mxu0 0.0
        %312 = vmatpush1.msra.mxu0 0.0
        %313 = vmatprep.subr.mxu0 0.0
        %314 = vmatpush1.msra.mxu0 0.0
        %315 = vmatprep.subr.mxu0 0.0
        %316 = vmatpush1.msra.mxu0 0.0
        %317 = vmatprep.subr.mxu0 0.0
        %318 = vmatpush1.msra.mxu0 0.0
        %319 = vmatprep.subr.mxu0 0.0
        %320 = vmatpush1.msra.mxu0 0.0
        %321 = vmatprep.subr.mxu0 0.0
        %322 = vmatpush1.msra.mxu0 0.0
        %323 = vmatprep.subr.mxu0 0.0
        %324 = vmatpush1.msra.mxu0 0.0
        %325 = vmatprep.subr.mxu0 0.0
        %326 = vmatpush1.msra.mxu0 0.0
        %327 = vmatprep.subr.mxu0 0.0
        %328 = vmatpush1.msra.mxu0 0.0
        %329 = vmatprep.subr.mxu0 0.0
        %330 = vmatpush1.msra.mxu0 0.0
        %331 = vmatprep.subr.mxu0 0.0
        %332 = vmatpush1.msra.mxu0 0.0
        %333 = vmatprep.subr.mxu0 0.0
        %334 = vmatpush1.msra.mxu0 0.0
        %335 = vmatprep.subr.mxu0 0.0
        %336 = vmatpush1.msra.mxu0 0.0
        %337 = vmatprep.subr.mxu0 0.0
        %338 = vmatpush1.msra.mxu0 0.0
        %339 = vmatprep.subr.mxu0 0.0
        %340 = vmatpush1.msra.mxu0 0.0
        %341 = vmatprep.subr.mxu0 0.0
        %342 = vmatpush1.msra.mxu0 0.0
        %343 = vmatprep.subr.mxu0 0.0
        %344 = vmatpush1.msra.mxu0 0.0
        %345 = vmatprep.subr.mxu0 0.0
        %346 = vmatpush1.msra.mxu0 0.0
        %347 = vmatprep.subr.mxu0 0.0
        %348 = vmatpush1.msra.mxu0 0.0
        %349 = vmatprep.subr.mxu0 0.0
        %350 = vmatpush1.msra.mxu0 0.0
        %351 = vmatprep.subr.mxu0 0.0
        %352 = vmatpush1.msra.mxu0 0.0
        %353 = vmatprep.subr.mxu0 0.0
        %354 = vmatpush1.msra.mxu0 0.0
        %355 = vmatprep.subr.mxu0 0.0
        %356 = vmatpush1.msra.mxu0 0.0
        %357 = vmatprep.subr.mxu0 0.0
        %358 = vmatpush1.msra.mxu0 0.0
        %359 = vmatprep.subr.mxu0 0.0
        %360 = vmatpush1.msra.mxu0 0.0
        %361 = vmatprep.mubr.f32.mxu0 0.0
        %362 = vmatmul.mubr.f32.gmra.mrb[0].mxu0 %v287
        %v363 = vpop.f32.mrb[0].mxu0
        %v364 = vadd.f32 %v268, %v363
        %v365 = vpop.f32.mrb[0].mxu0
        %366 = vmatprep.mubr.f32.mxu0 0.0
        %367 = vmatmul.mubr.f32.gmra.mrb[0].mxu0 %v289
        %v368 = vpop.f32.mrb[0].mxu0
        %v369 = vadd.f32 %v273, %v368
        %v370 = vpop.f32.mrb[0].mxu0
        %371 = vmatprep.mubr.f32.mxu0 0.0
        %372 = vmatmul.mubr.f32.gmra.mrb[0].mxu0 %v291
        %v373 = vpop.f32.mrb[0].mxu0
        %v374 = vadd.f32 %v278, %v373
        %v375 = vpop.f32.mrb[0].mxu0
        %376 = vdwg.mxu0
        %v377 = vmax.f32 %v364, 0.0
        %v378 = vmax.f32 %v369, 0.0
        %v379 = vmax.f32 %v374, 0.0
        %380 = vset.pattern.permute.xlu0 35
        %381 = vperm.xlu0 %380, %v164
        %v382 = vpop.permute.xlu0 %381
        %384 = vset.pattern.permute.xlu0 35
        %385 = vperm.xlu0 %384, %v165
        %v386 = vpop.permute.xlu0 %385
        %388 = vrot.lane.b32.xlu0 %v164, 113
        %v389 = vpop.permute.xlu0 %388
        %390 = vrot.lane.b32.xlu0 %v165, 113
        %v391 = vpop.permute.xlu0 %390
        %vm392 = vcmask 162816
        %v393 = vsel %vm392, %v389, 0
        %v395 = vsel %vm392, %v391, 0
        %vm397 = vcmask 1043456
        %v399 = vsel %vm397, %v379, 0
        %401 = vmatprep.subr.mxu0 0.0
        %402 = vmatpush1.msra.mxu0 %v377
        %403 = vmatprep.subr.mxu0 0.0
        %404 = vmatpush1.msra.mxu0 %v378
        %405 = vmatprep.subr.mxu0 0.0
        %406 = vmatpush1.msra.mxu0 %v399
        %407 = vmatprep.subr.mxu0 0.0
        %408 = vmatpush1.msra.mxu0 0.0
        %409 = vmatprep.subr.mxu0 0.0
        %410 = vmatpush1.msra.mxu0 0.0
        %411 = vmatprep.subr.mxu0 0.0
        %412 = vmatpush1.msra.mxu0 0.0
        %413 = vmatprep.subr.mxu0 0.0
        %414 = vmatpush1.msra.mxu0 0.0
        %415 = vmatprep.subr.mxu0 0.0
        %416 = vmatpush1.msra.mxu0 0.0
        %417 = vmatprep.subr.mxu0 0.0
        %418 = vmatpush1.msra.mxu0 0.0
        %419 = vmatprep.subr.mxu0 0.0
        %420 = vmatpush1.msra.mxu0 0.0
        %421 = vmatprep.subr.mxu0 0.0
        %422 = vmatpush1.msra.mxu0 0.0
        %423 = vmatprep.subr.mxu0 0.0
        %424 = vmatpush1.msra.mxu0 0.0
        %425 = vmatprep.subr.mxu0 0.0
        %426 = vmatpush1.msra.mxu0 0.0
        %427 = vmatprep.subr.mxu0 0.0
        %428 = vmatpush1.msra.mxu0 0.0
        %429 = vmatprep.subr.mxu0 0.0
        %430 = vmatpush1.msra.mxu0 0.0
        %431 = vmatprep.subr.mxu0 0.0
        %432 = vmatpush1.msra.mxu0 0.0
        %433 = vmatprep.subr.mxu0 0.0
        %434 = vmatpush1.msra.mxu0 0.0
        %435 = vmatprep.subr.mxu0 0.0
        %436 = vmatpush1.msra.mxu0 0.0
        %437 = vmatprep.subr.mxu0 0.0
        %438 = vmatpush1.msra.mxu0 0.0
        %439 = vmatprep.subr.mxu0 0.0
        %440 = vmatpush1.msra.mxu0 0.0
        %441 = vmatprep.subr.mxu0 0.0
        %442 = vmatpush1.msra.mxu0 0.0
        %443 = vmatprep.subr.mxu0 0.0
        %444 = vmatpush1.msra.mxu0 0.0
        %445 = vmatprep.subr.mxu0 0.0
        %446 = vmatpush1.msra.mxu0 0.0
        %447 = vmatprep.subr.mxu0 0.0
        %448 = vmatpush1.msra.mxu0 0.0
        %449 = vmatprep.subr.mxu0 0.0
        %450 = vmatpush1.msra.mxu0 0.0
        %451 = vmatprep.subr.mxu0 0.0
        %452 = vmatpush1.msra.mxu0 0.0
        %453 = vmatprep.subr.mxu0 0.0
        %454 = vmatpush1.msra.mxu0 0.0
        %455 = vmatprep.subr.mxu0 0.0
        %456 = vmatpush1.msra.mxu0 0.0
        %457 = vmatprep.subr.mxu0 0.0
        %458 = vmatpush1.msra.mxu0 0.0
        %459 = vmatprep.subr.mxu0 0.0
        %460 = vmatpush1.msra.mxu0 0.0
        %461 = vmatprep.subr.mxu0 0.0
        %462 = vmatpush1.msra.mxu0 0.0
        %463 = vmatprep.subr.mxu0 0.0
        %464 = vmatpush1.msra.mxu0 0.0
        %465 = vmatprep.mubr.f32.mxu0 0.0
        %466 = vmatmul.mubr.f32.gmra.mrb[0].mxu0 %v393
        %v467 = vpop.f32.mrb[0].mxu0
        %v468 = vadd.f32 %v382, %v467
        %v469 = vpop.f32.mrb[0].mxu0
        %470 = vmatprep.mubr.f32.mxu0 0.0
        %471 = vmatmul.mubr.f32.gmra.mrb[0].mxu0 %v395
        %v472 = vpop.f32.mrb[0].mxu0
        %v473 = vadd.f32 %v386, %v472
        %v474 = vpop.f32.mrb[0].mxu0
        %475 = vdwg.mxu0
        %v476 = vmax.f32 %v468, 0.0
        %v477 = vmax.f32 %v473, 0.0
        %v478 = vld [vmem:[%s1] sm:$0x1]
        %480 = vset.pattern.permute.xlu0 46
        %481 = vperm.xlu0 %480, %v478
        %v482 = vpop.permute.xlu0 %481
        %484 = vrot.lane.b32.xlu0 %v478, 92
        %v485 = vpop.permute.xlu0 %484
        %v486 = vsel %vm286, %v485, 0
        %v489 = vsel %vm293, %v477, 0
        %491 = vmatprep.subr.mxu0 0.0
        %492 = vmatpush1.msra.mxu0 %v476
        %493 = vmatprep.subr.mxu0 0.0
        %494 = vmatpush1.msra.mxu0 %v489
        %495 = vmatprep.subr.mxu0 0.0
        %496 = vmatpush1.msra.mxu0 0.0
        %497 = vmatprep.subr.mxu0 0.0
        %498 = vmatpush1.msra.mxu0 0.0
        %499 = vmatprep.subr.mxu0 0.0
        %500 = vmatpush1.msra.mxu0 0.0
        %501 = vmatprep.subr.mxu0 0.0
        %502 = vmatpush1.msra.mxu0 0.0
        %503 = vmatprep.subr.mxu0 0.0
        %504 = vmatpush1.msra.mxu0 0.0
        %505 = vmatprep.subr.mxu0 0.0
        %506 = vmatpush1.msra.mxu0 0.0
        %507 = vmatprep.subr.mxu0 0.0
        %508 = vmatpush1.msra.mxu0 0.0
        %509 = vmatprep.subr.mxu0 0.0
        %510 = vmatpush1.msra.mxu0 0.0
        %511 = vmatprep.subr.mxu0 0.0
        %512 = vmatpush1.msra.mxu0 0.0
        %513 = vmatprep.subr.mxu0 0.0
        %514 = vmatpush1.msra.mxu0 0.0
        %515 = vmatprep.subr.mxu0 0.0
        %516 = vmatpush1.msra.mxu0 0.0
        %517 = vmatprep.subr.mxu0 0.0
        %518 = vmatpush1.msra.mxu0 0.0
        %519 = vmatprep.subr.mxu0 0.0
        %520 = vmatpush1.msra.mxu0 0.0
        %521 = vmatprep.subr.mxu0 0.0
        %522 = vmatpush1.msra.mxu0 0.0
        %523 = vmatprep.subr.mxu0 0.0
        %524 = vmatpush1.msra.mxu0 0.0
        %525 = vmatprep.subr.mxu0 0.0
        %526 = vmatpush1.msra.mxu0 0.0
        %527 = vmatprep.subr.mxu0 0.0
        %528 = vmatpush1.msra.mxu0 0.0
        %529 = vmatprep.subr.mxu0 0.0
        %530 = vmatpush1.msra.mxu0 0.0
        %531 = vmatprep.subr.mxu0 0.0
        %532 = vmatpush1.msra.mxu0 0.0
        %533 = vmatprep.subr.mxu0 0.0
        %534 = vmatpush1.msra.mxu0 0.0
        %535 = vmatprep.subr.mxu0 0.0
        %536 = vmatpush1.msra.mxu0 0.0
        %537 = vmatprep.subr.mxu0 0.0
        %538 = vmatpush1.msra.mxu0 0.0
        %539 = vmatprep.subr.mxu0 0.0
        %540 = vmatpush1.msra.mxu0 0.0
        %541 = vmatprep.subr.mxu0 0.0
        %542 = vmatpush1.msra.mxu0 0.0
        %543 = vmatprep.subr.mxu0 0.0
        %544 = vmatpush1.msra.mxu0 0.0
        %545 = vmatprep.subr.mxu0 0.0
        %546 = vmatpush1.msra.mxu0 0.0
        %547 = vmatprep.subr.mxu0 0.0
        %548 = vmatpush1.msra.mxu0 0.0
        %549 = vmatprep.subr.mxu0 0.0
        %550 = vmatpush1.msra.mxu0 0.0
        %551 = vmatprep.subr.mxu0 0.0
        %552 = vmatpush1.msra.mxu0 0.0
        %553 = vmatprep.subr.mxu0 0.0
        %554 = vmatpush1.msra.mxu0 0.0
        %555 = vmatprep.mubr.f32.mxu0 0.0
        %556 = vmatmul.mubr.f32.gmra.mrb[0].mxu0 %v486
        %v557 = vpop.f32.mrb[0].mxu0
        %v558 = vadd.f32 %v482, %v557
        %v559 = vpop.f32.mrb[0].mxu0
        %560 = vdwg.mxu0
        %561 = vst [vmem:[%s155] sm:$0x1] %v558
        %s562 = sand.u32 %s87, 1
        %s563 = scalar_lea.sflag [#allocation3], %s562
        %s564 = sand.u32 %s87, 1
        %s565 = scalar_lea.vmem [#allocation2], %s564
        // Predicated region
        $region29: #{dqn_edgewise_fc_forward.1} parent=27 // pred_check
          %p566 = pneg %p97
        $region30: #{dqn_edgewise_fc_forward.1} parent=27 // pred_check_branch
          %568 = sbr.rel (%p566) target = $region32
        $region31: #{dqn_edgewise_fc_forward.1} parent=27 // pred_region
          %s570 = ssub.s32 16, 16
          %571 = vsyncadd %s563, %s570
          %s572 = sadd.s32 %s21, %s20
          %s573 = smul.addr %s572, 16
          %s574 = scalar_lea.hbm %s2, %s573
          %s576 = sshll.u32 %s565, 4
          %s577 = int_to_ptr.vmem [resolvable:$true] %s576
          %579 = dma.vmem_to_hbm [thread:$0]  %s577, 16, %s574, %s563
        $region32: #{dqn_edgewise_fc_forward.1} parent=27 // pred_fallthru
          _
      $region28: #{dqn_edgewise_fc_forward.1} parent=5 // pred_fallthru
        _
      %p580 = scmp.le.s32.totalorder 2, %s11
      // Predicated region
      $region33: #{dqn_edgewise_fc_forward.1} parent=5 // pred_check
        %p581 = pneg %p580
      $region34: #{dqn_edgewise_fc_forward.1} parent=5 // pred_check_branch
        %583 = sbr.rel (%p581) target = $region36
      $region35: #{dqn_edgewise_fc_forward.1} parent=5 // pred_region
        %s584 = ssub.s32 %s11, 2
        // Predicated region
        $region37: #{dqn_edgewise_fc_forward.1} parent=35 // pred_check
          %p585 = pneg %p103
        $region38: #{dqn_edgewise_fc_forward.1} parent=35 // pred_check_branch
          %587 = sbr.rel (%p585) target = $region40
        $region39: #{dqn_edgewise_fc_forward.1} parent=35 // pred_region
          %s588 = sand.u32 %s88, 1
          %s589 = scalar_lea.sflag [#allocation3], %s588
          %s590 = sand.u32 %s88, 1
          %s591 = scalar_lea.vmem [#allocation2], %s590
          %592 = dma.done %s589, 16
        $region40: #{dqn_edgewise_fc_forward.1} parent=35 // pred_fallthru
          _
      $region36: #{dqn_edgewise_fc_forward.1} parent=5 // pred_fallthru
        _
    $region6: #{dqn_edgewise_fc_forward.1} parent=1 // loop_footer
      %s15 = sadd.s32 1, %s11
    $region7: #{dqn_edgewise_fc_forward.1} parent=1 // loop_footer_branch
      %10 = sbr.rel target = $region3
    $region8: #{dqn_edgewise_fc_forward.1} parent=1 // loop_exit
      _
    %593 = vsyncpa [#allocation3], 1
    %s594 = scalar_lea.sflag [#allocation3], 1
    %595 = vsyncpa %s594, 1

</llo_original>
